<compile_context>
chip_gen: v7x
topology: tpu7x:2x2x1
jax: 0.10.0
libtpu: 0.0.40
codegen_flags: <defaults>
</compile_context>

<pallas_src>
import functools
import math

import jax
import jax.numpy as jnp
from jax.experimental import pallas as pl
from jax.experimental.pallas import tpu as pltpu

_LANE = 128  # lane width (last-dim alignment)


def _round_up(x, m):
    return ((x + m - 1) // m) * m


def _cdiv(a, b):
    return (a + b - 1) // b


def _sublane(dtype):
    # Sublane packing for the second-to-last dim: f32 -> 8, bf16 -> 16, int8/fp8 -> 32.
    return 8 * (4 // jnp.dtype(dtype).itemsize)


def _apply_activation(y, activation, approx_swish=False):
    if activation == "relu":
        return jnp.maximum(y, 0.0)
    if activation == "tanh":
        return jnp.tanh(y)
    if activation == "swish":
        if approx_swish:
            # EUP-relief variant; enable only if a bundle dump shows the EUP slot binding.
            return y * pl.reciprocal(1.0 + jnp.exp(-y), approx=True)
        return y * jax.nn.sigmoid(y)  # SiLU
    raise ValueError(f"activation {activation} not supported")


# --------------------------------------------------------------------------- kernels


def _encoder_resident_kernel(*refs, n_layers, activation, compute_dtype, approx_swish):
    """refs = (x_ref, w0_ref, b_ref, [wh_ref,] o_ref); all operands VMEM-resident.

    x_ref : (tm, k0_pad) compute_dtype batch tile
    w0_ref: (k0_pad, n_pad) compute_dtype (pre-cast, pre-padded)
    b_ref : (n_layers, n_pad) f32 bias rows
    wh_ref: (n_layers-1, n_pad, n_pad) compute_dtype hidden-layer weights
    o_ref : (tm, n_pad) lane-dense output tile
    """
    if n_layers > 1:
        x_ref, w0_ref, b_ref, wh_ref, o_ref = refs
    else:
        x_ref, w0_ref, b_ref, o_ref = refs
        wh_ref = None

    # Layer 0: MXU matmul with f32 accumulation; bias-add + nonlinearity in f32.
    y = jnp.dot(x_ref[...], w0_ref[...], preferred_element_type=jnp.float32)
    y = y + b_ref[0:1, :]
    h = _apply_activation(y, activation, approx_swish)

    for l in range(1, n_layers):
        y = jnp.dot(h.astype(compute_dtype), wh_ref[l - 1],
                    preferred_element_type=jnp.float32)
        y = y + b_ref[l:l + 1, :]
        h = _apply_activation(y, activation, approx_swish)

    o_ref[...] = h.astype(o_ref.dtype)


def _encoder_streamed_kernel(x_ref, w0_ref, b_ref, wh_hbm, o_ref, wbuf, sem,
                             *, n_layers, activation, compute_dtype, approx_swish):
    """Streamed-weights fallback: hidden-layer weights stay in HBM (pl.ANY) and are
    double-buffered into VMEM with manual DMA (prefetch layer l+1 while computing l)."""
    n_hidden = n_layers - 1

    # Prime: start fetching hidden layer 0's weight while the MXU runs layer 0.
    pltpu.make_async_copy(wh_hbm.at[0], wbuf.at[0], sem.at[0]).start()

    y = jnp.dot(x_ref[...], w0_ref[...], preferred_element_type=jnp.float32)
    y = y + b_ref[0:1, :]
    h = _apply_activation(y, activation, approx_swish)

    for l in range(n_hidden):
        slot = l & 1
        pltpu.make_async_copy(wh_hbm.at[l], wbuf.at[slot], sem.at[slot]).wait()
        if l + 1 < n_hidden:
            pltpu.make_async_copy(wh_hbm.at[l + 1], wbuf.at[1 - slot],
                                  sem.at[1 - slot]).start()
        y = jnp.dot(h.astype(compute_dtype), wbuf[slot],
                    preferred_element_type=jnp.float32)
        y = y + b_ref[l + 1:l + 2, :]
        h = _apply_activation(y, activation, approx_swish)

    o_ref[...] = h.astype(o_ref.dtype)


# --------------------------------------------------------------------------- params


def init_encoder_params(key, *, idim, hdim, n_layers, dtype=jnp.float32):
    """Deterministic init mimicking torch.nn.Linear (uniform +/- 1/sqrt(fan_in)).
    Returns list of (W, b) with W stored as (in_features, out_features)."""
    params = []
    dims = [(idim, hdim)] + [(hdim, hdim)] * (n_layers - 1)
    for fan_in, fan_out in dims:
        key, kw, kb = jax.random.split(key, 3)
        bound = 1.0 / math.sqrt(fan_in)
        w = jax.random.uniform(kw, (fan_in, fan_out), dtype, minval=-bound, maxval=bound)
        b = jax.random.uniform(kb, (fan_out,), dtype, minval=-bound, maxval=bound)
        params.append((w, b))
    return params


def prepare_encoder_params(params, *, compute_dtype=jnp.bfloat16):
    """One-time prepare (OUTSIDE the hot path): zero-pad every weight/bias to lane
    multiples of 128 and cast weights to `compute_dtype`.

    Zero padding is semantics-preserving: padded weight rows/cols and bias entries are
    0 and relu/tanh/swish(0) == 0; padded output columns are sliced off post-kernel.
    """
    n_layers = len(params)
    idim, hdim = params[0][0].shape
    k0_pad = _round_up(idim, _LANE)
    n_pad = _round_up(hdim, _LANE)

    w0, b0 = params[0]
    w0_p = jnp.zeros((k0_pad, n_pad), compute_dtype).at[:idim, :hdim].set(
        w0.astype(compute_dtype))

    b_all = jnp.zeros((n_layers, n_pad), jnp.float32)
    b_all = b_all.at[0, :hdim].set(b0.astype(jnp.float32))

    if n_layers > 1:
        wh = jnp.zeros((n_layers - 1, n_pad, n_pad), compute_dtype)
        for l in range(1, n_layers):
            w, b = params[l]
            wh = wh.at[l - 1, :hdim, :hdim].set(w.astype(compute_dtype))
            b_all = b_all.at[l, :hdim].set(b.astype(jnp.float32))
    else:
        wh = None

    return dict(w0=w0_p, w_hid=wh, b=b_all, idim=idim, hdim=hdim,
                k0_pad=k0_pad, n_pad=n_pad, n_layers=n_layers,
                compute_dtype=jnp.dtype(compute_dtype))


# --------------------------------------------------------------------------- forward


def encoder_forward(prepared, x, *, activation, dropout=0.0, tm_max=256,
                    weight_streaming=None, resident_vmem_budget=40 * (1 << 20),
                    approx_swish=False):
    """Forward pass of `Encoder` as a single fused Pallas kernel.

    x: (batch, idim) -> (batch, hdim). `prepared` comes from `prepare_encoder_params`.
    On v5e/v6e, tm_max may be raised toward 512 when VMEM allows (128 MiB there).
    """
    if dropout != 0.0:
        # TODO(synk): training-mode dropout (pltpu.prng_random_bits masking) not
        # implemented; dropout == 0 / eval mode matches PyTorch exactly.
        raise NotImplementedError("dropout > 0 not supported (eval-mode kernel)")

    M, idim = x.shape
    assert idim == prepared["idim"], "input feature dim mismatch"
    n_layers = prepared["n_layers"]
    hdim = prepared["hdim"]
    k0_pad = prepared["k0_pad"]
    n_pad = prepared["n_pad"]
    compute_dtype = prepared["compute_dtype"]
    out_dtype = x.dtype
    c_item = compute_dtype.itemsize
    o_item = jnp.dtype(out_dtype).itemsize

    # Batch tiling: <= tm_max rows/step, >= 2 grid steps when possible (so the
    # "parallel" axis can shard across v7x's 2 TensorCores), minimal row padding,
    # sublane rounding matched to the compute dtype packing.
    sub = _sublane(compute_dtype)
    n_steps = max(2, _cdiv(M, tm_max))
    tm = _round_up(max(_cdiv(M, n_steps), sub), sub)
    tm = min(tm, _round_up(tm_max, sub))
    m_pad = _round_up(M, tm)
    grid = (m_pad // tm,)

    # Pad batch/features and cast x once in the wrapper (halves x DMA for bf16).
    x_p = jnp.zeros((m_pad, k0_pad), compute_dtype).at[:M, :idim].set(
        x.astype(compute_dtype))

    n_hidden = n_layers - 1
    w0_bytes = k0_pad * n_pad * c_item
    wh_bytes = n_hidden * n_pad * n_pad * c_item
    b_bytes = n_layers * n_pad * 4
    act_bytes = 2 * tm * k0_pad * c_item + 2 * tm * n_pad * o_item

    if weight_streaming is None:
        weight_streaming = (w0_bytes + wh_bytes + b_bytes + act_bytes
                            > resident_vmem_budget)
    weight_streaming = bool(weight_streaming) and n_hidden > 0

    # Advisory cost estimate for XLA scheduling around the custom call.
    flops = 2 * m_pad * (k0_pad * n_pad + n_hidden * n_pad * n_pad)
    transcendentals = 0 if activation == "relu" else n_layers * m_pad * n_pad
    bytes_accessed = (x_p.size * c_item + w0_bytes + wh_bytes + b_bytes
                      + m_pad * n_pad * o_item)
    cost = pl.CostEstimate(flops=flops, transcendentals=transcendentals,
                           bytes_accessed=bytes_accessed)

    # Grid-invariant operands are single-buffered; only the batch-tiled x / out
    # get the default double-buffered pipeline.
    x_spec = pl.BlockSpec((tm, k0_pad), lambda i: (i, 0))
    w0_spec = pl.BlockSpec((k0_pad, n_pad), lambda i: (0, 0),
                           pipeline_mode=pl.Buffered(1))
    b_spec = pl.BlockSpec((n_layers, n_pad), lambda i: (0, 0),
                          pipeline_mode=pl.Buffered(1))
    out_spec = pl.BlockSpec((tm, n_pad), lambda i: (i, 0))

    if not weight_streaming:
        # ---- fully VMEM-resident weights (small / medium hdim) ----
        inputs = [x_p, prepared["w0"], prepared["b"]]
        in_specs = [x_spec, w0_spec, b_spec]
        if n_hidden > 0:
            inputs.append(prepared["w_hid"])
            in_specs.append(pl.BlockSpec((n_hidden, n_pad, n_pad),
                                         lambda i: (0, 0, 0),
                                         pipeline_mode=pl.Buffered(1)))
        scratch_shapes = []
        kernel = functools.partial(
            _encoder_resident_kernel, n_layers=n_layers, activation=activation,
            compute_dtype=compute_dtype, approx_swish=approx_swish)
        vmem_needed = w0_bytes + wh_bytes + b_bytes + act_bytes
    else:
        # ---- streamed weights: hidden-layer W double-buffered from HBM ----
        inputs = [x_p, prepared["w0"], prepared["b"], prepared["w_hid"]]
        in_specs = [x_spec, w0_spec, b_spec, pl.BlockSpec(memory_space=pl.ANY)]
        scratch_shapes = [pltpu.VMEM((2, n_pad, n_pad), compute_dtype),
                          pltpu.SemaphoreType.DMA((2,))]
        kernel = functools.partial(
            _encoder_streamed_kernel, n_layers=n_layers, activation=activation,
            compute_dtype=compute_dtype, approx_swish=approx_swish)
        vmem_needed = w0_bytes + b_bytes + 2 * n_pad * n_pad * c_item + act_bytes

    # Size scoped VMEM to the actual footprint + headroom (floor at the 32 MiB default).
    vmem_limit = int(min(128 * (1 << 20), max(32 * (1 << 20), 1.25 * vmem_needed)))

    out_padded = pl.pallas_call(
        kernel,
        out_shape=jax.ShapeDtypeStruct((m_pad, n_pad), out_dtype),
        grid_spec=pltpu.PrefetchScalarGridSpec(
            num_scalar_prefetch=0,
            grid=grid,
            in_specs=in_specs,
            out_specs=out_spec,
            scratch_shapes=scratch_shapes,
        ),
        compiler_params=pltpu.CompilerParams(
            dimension_semantics=("parallel",),
            vmem_limit_bytes=vmem_limit,
        ),
        cost_estimate=cost,
    )(*inputs)

    return out_padded[:M, :hdim]


# --------------------------------------------------------------------------- main

def _reference(params, x, activation):
    h = x
    for w, b in params:
        h = jnp.dot(h, w, precision=jax.lax.Precision.HIGHEST) + b
        if activation == "relu":
            h = jnp.maximum(h, 0.0)
        elif activation == "tanh":
            h = jnp.tanh(h)
        else:
            h = h * jax.nn.sigmoid(h)
    return h


if __name__ == "__main__":
    # Small config consistent with the module's forward pass: x is (batch, idim).
    idim, hdim, n_layers = 32, 64, 3
    activation = "swish"
    batch = 8

    key = jax.random.PRNGKey(0)
    key, kx = jax.random.split(key)
    x = jax.random.normal(kx, (batch, idim), jnp.float32)
    params = init_encoder_params(key, idim=idim, hdim=hdim, n_layers=n_layers)
    ref = _reference(params, x, activation)

    # (1) f32 correctness mode (resident weights).
    prep_f32 = prepare_encoder_params(params, compute_dtype=jnp.float32)
    out_f32 = jax.block_until_ready(
        encoder_forward(prep_f32, x, activation=activation, dropout=0.0))
    assert out_f32.shape == (batch, hdim)
    assert jnp.allclose(out_f32, ref, atol=1e-3, rtol=1e-3), "f32 mismatch vs reference"

    # (2) bf16 benchmark mode (default dtype; full MXU rate on v5e/v6e/v7x).
    prep_bf16 = prepare_encoder_params(params)  # bf16 weights, padded once
    out_bf16 = jax.block_until_ready(
        encoder_forward(prep_bf16, x, activation=activation, dropout=0.0))
    assert out_bf16.shape == (batch, hdim)
    assert jnp.allclose(out_bf16, ref, atol=5e-2, rtol=5e-2), "bf16 mismatch vs reference"

    # (3) streamed-weights fallback (forced here; auto-selected when resident weights
    #     would not fit the VMEM budget, e.g. large hdim on v7x's 64 MiB).
    out_str = jax.block_until_ready(
        encoder_forward(prep_bf16, x, activation=activation, dropout=0.0,
                        weight_streaming=True))
    assert out_str.shape == (batch, hdim)
    assert jnp.allclose(out_str, ref, atol=5e-2, rtol=5e-2), "streamed mismatch vs reference"

    print("KERNEL_OK")
</pallas_src>

<mosaic_0001>
module attributes {stable_mosaic.version = 11 : i64} {
  func.func @_encoder_resident_kernel(%arg0: i32, %arg1: memref<8x128xf32, #tpu.memory_space<vmem>>, %arg2: memref<128x128xf32, #tpu.memory_space<vmem>>, %arg3: memref<3x128xf32, #tpu.memory_space<vmem>>, %arg4: memref<2x128x128xf32, #tpu.memory_space<vmem>>, %arg5: memref<8x128xf32, #tpu.memory_space<vmem>>) attributes {dimension_semantics = [#tpu.dimension_semantics<parallel>], iteration_bounds = array<i64: 1>, scalar_prefetch = 0 : i64, scratch_operands = 0 : i64, tpu.core_type = #tpu.core_type<tc>, window_params = [{transform_indices = @transform_0, window_bounds = array<i64: 8, 128>}, {pipeline_mode = #tpu.pipeline_mode<synchronous>, transform_indices = @transform_1, window_bounds = array<i64: 128, 128>}, {pipeline_mode = #tpu.pipeline_mode<synchronous>, transform_indices = @transform_2, window_bounds = array<i64: 3, 128>}, {pipeline_mode = #tpu.pipeline_mode<synchronous>, transform_indices = @transform_3, window_bounds = array<i64: 2, 128, 128>}, {transform_indices = @transform_4, window_bounds = array<i64: 8, 128>}]} {
    %c0 = arith.constant 0 : index
    %c0_0 = arith.constant 0 : index
    %0 = vector.load %arg1[%c0, %c0_0] : memref<8x128xf32, #tpu.memory_space<vmem>>, vector<8x128xf32>
    %c0_1 = arith.constant 0 : index
    %c0_2 = arith.constant 0 : index
    %1 = vector.load %arg2[%c0_1, %c0_2] : memref<128x128xf32, #tpu.memory_space<vmem>>, vector<128x128xf32>
    %cst = arith.constant dense<0.000000e+00> : vector<8x128xf32>
    %2 = tpu.matmul %0, %1, %cst {dimension_numbers = #tpu.dot_dimension_numbers<[1], [0], [0], [1], [0, 0, 1, 1], [], []>} : vector<8x128xf32>, vector<128x128xf32>, vector<8x128xf32> -> vector<8x128xf32>
    %c0_3 = arith.constant 0 : index
    %c0_4 = arith.constant 0 : index
    %3 = vector.load %arg3[%c0_3, %c0_4] : memref<3x128xf32, #tpu.memory_space<vmem>>, vector<1x128xf32>
    %4 = vector.broadcast %3 : vector<1x128xf32> to vector<8x128xf32>
    %5 = arith.addf %2, %4 : vector<8x128xf32>
    %6 = arith.negf %5 : vector<8x128xf32>
    %7 = math.exp %6 : vector<8x128xf32>
    %cst_5 = arith.constant 1.000000e+00 : f32
    %8 = vector.broadcast %cst_5 : f32 to vector<8x128xf32>
    %9 = arith.addf %8, %7 : vector<8x128xf32>
    %10 = arith.divf %8, %9 : vector<8x128xf32>
    %11 = arith.mulf %5, %10 : vector<8x128xf32>
    %c0_6 = arith.constant 0 : index
    %c0_7 = arith.constant 0 : index
    %c0_8 = arith.constant 0 : index
    %12 = vector.load %arg4[%c0_6, %c0_7, %c0_8] : memref<2x128x128xf32, #tpu.memory_space<vmem>>, vector<1x128x128xf32>
    %13 = vector.shape_cast %12 : vector<1x128x128xf32> to vector<128x128xf32>
    %cst_9 = arith.constant dense<0.000000e+00> : vector<8x128xf32>
    %14 = tpu.matmul %11, %13, %cst_9 {dimension_numbers = #tpu.dot_dimension_numbers<[1], [0], [0], [1], [0, 0, 1, 1], [], []>} : vector<8x128xf32>, vector<128x128xf32>, vector<8x128xf32> -> vector<8x128xf32>
    %c1 = arith.constant 1 : index
    %c0_10 = arith.constant 0 : index
    %15 = vector.load %arg3[%c1, %c0_10] : memref<3x128xf32, #tpu.memory_space<vmem>>, vector<1x128xf32>
    %16 = vector.broadcast %15 : vector<1x128xf32> to vector<8x128xf32>
    %17 = arith.addf %14, %16 : vector<8x128xf32>
    %18 = arith.negf %17 : vector<8x128xf32>
    %19 = math.exp %18 : vector<8x128xf32>
    %cst_11 = arith.constant 1.000000e+00 : f32
    %20 = vector.broadcast %cst_11 : f32 to vector<8x128xf32>
    %21 = arith.addf %20, %19 : vector<8x128xf32>
    %22 = arith.divf %20, %21 : vector<8x128xf32>
    %23 = arith.mulf %17, %22 : vector<8x128xf32>
    %c1_12 = arith.constant 1 : index
    %c0_13 = arith.constant 0 : index
    %c0_14 = arith.constant 0 : index
    %24 = vector.load %arg4[%c1_12, %c0_13, %c0_14] : memref<2x128x128xf32, #tpu.memory_space<vmem>>, vector<1x128x128xf32>
    %25 = vector.shape_cast %24 : vector<1x128x128xf32> to vector<128x128xf32>
    %cst_15 = arith.constant dense<0.000000e+00> : vector<8x128xf32>
    %26 = tpu.matmul %23, %25, %cst_15 {dimension_numbers = #tpu.dot_dimension_numbers<[1], [0], [0], [1], [0, 0, 1, 1], [], []>} : vector<8x128xf32>, vector<128x128xf32>, vector<8x128xf32> -> vector<8x128xf32>
    %c2 = arith.constant 2 : index
    %c0_16 = arith.constant 0 : index
    %27 = vector.load %arg3[%c2, %c0_16] : memref<3x128xf32, #tpu.memory_space<vmem>>, vector<1x128xf32>
    %28 = vector.broadcast %27 : vector<1x128xf32> to vector<8x128xf32>
    %29 = arith.addf %26, %28 : vector<8x128xf32>
    %30 = arith.negf %29 : vector<8x128xf32>
    %31 = math.exp %30 : vector<8x128xf32>
    %cst_17 = arith.constant 1.000000e+00 : f32
    %32 = vector.broadcast %cst_17 : f32 to vector<8x128xf32>
    %33 = arith.addf %32, %31 : vector<8x128xf32>
    %34 = arith.divf %32, %33 : vector<8x128xf32>
    %35 = arith.mulf %29, %34 : vector<8x128xf32>
    %c0_18 = arith.constant 0 : index
    %c0_19 = arith.constant 0 : index
    %36 = vector.load %arg5[%c0_18, %c0_19] : memref<8x128xf32, #tpu.memory_space<vmem>>, vector<8x128xf32>
    tpu.vector_store %arg5[%c0_18, %c0_19], %35 {strides = array<i32>} : memref<8x128xf32, #tpu.memory_space<vmem>>, vector<8x128xf32>,
    return
  }
  func.func @transform_0(%arg0: i32) -> (i32, i32) {
    %c0_i32 = arith.constant 0 : i32
    %c0_i32_0 = arith.constant 0 : i32
    return %arg0, %c0_i32 : i32, i32
  }
  func.func @transform_1(%arg0: i32) -> (i32, i32) {
    %c0_i32 = arith.constant 0 : i32
    %c0_i32_0 = arith.constant 0 : i32
    %c0_i32_1 = arith.constant 0 : i32
    return %c0_i32, %c0_i32_0 : i32, i32
  }
  func.func @transform_2(%arg0: i32) -> (i32, i32) {
    %c0_i32 = arith.constant 0 : i32
    %c0_i32_0 = arith.constant 0 : i32
    %c0_i32_1 = arith.constant 0 : i32
    return %c0_i32, %c0_i32_0 : i32, i32
  }
  func.func @transform_3(%arg0: i32) -> (i32, i32, i32) {
    %c0_i32 = arith.constant 0 : i32
    %c0_i32_0 = arith.constant 0 : i32
    %c0_i32_1 = arith.constant 0 : i32
    %c0_i32_2 = arith.constant 0 : i32
    return %c0_i32, %c0_i32_0, %c0_i32_1 : i32, i32, i32
  }
  func.func @transform_4(%arg0: i32) -> (i32, i32) {
    %c0_i32 = arith.constant 0 : i32
    %c0_i32_0 = arith.constant 0 : i32
    return %arg0, %c0_i32 : i32, i32
  }
}

</mosaic_0001>

<llo_original>
// kernel: tpu_custom_call.1
$region0: #{tpu_custom_call.1}
  #allocation0 [shape = 'u32[]', space=smem, size = 0x4, offset = 0x4, fixed_abs, tag = 'smem constant byte address 0x4 - core index']
  #allocation1 [shape = 'u32[144,128]{1,0:T(1,128)}', space=vmem, size = 0x12000, scoped, tag = 'internal scratch']
  %s0 = inlined_call_operand.hbm [shape: f32[8,128], index: 0, kind: input, shape index: {}]
  %s1 = inlined_call_operand.hbm [shape: f32[128,128], index: 1, kind: input, shape index: {}]
  %s2 = inlined_call_operand.vmem [shape: f32[3,128], index: 2, kind: input, shape index: {}]
  %s3 = inlined_call_operand.hbm [shape: f32[2,128,128], index: 3, kind: input, shape index: {}]
  %s4 = inlined_call_operand.hbm [shape: f32[8,128], index: 4, kind: output, shape index: {}]
  %s5 = sld [smem:[#allocation0]]
  $region38: #{tpu_custom_call.1} parent=0
    _
  %s7 = ssub.s32 1, %s5
  %s8 = scalar_select 0, %s7, %s5
  $region1: #{tpu_custom_call.1} parent=0
    #allocation2 [shape = 'u8[4096]{0}', space=vmem, size = 0x1000, scoped, tag = 'input window, operand 0, single buffered']
    #allocation3 [shape = 's32[1]{0}', space=sflag, size = 0x4, scoped, tag = 'scoped memory for tpu_custom_call.1']
    #allocation4 [shape = 's32[1]{0}', space=sflag, size = 0x4, scoped, tag = 'scoped memory for tpu_custom_call.1']
    #allocation5 [shape = 'u8[65536]{0}', space=vmem, size = 0x10000, scoped, tag = 'input window, operand 1, single buffered']
    #allocation6 [shape = 's32[1]{0}', space=sflag, size = 0x4, scoped, tag = 'scoped memory for tpu_custom_call.1']
    #allocation7 [shape = 'u8[131072]{0}', space=vmem, size = 0x20000, scoped, tag = 'input window, operand 3, single buffered']
    #allocation8 [shape = 'u8[4096]{0}', space=vmem, size = 0x1000, scoped, tag = 'output window, operand 0, single buffered']
    %9 = vsyncpa [#allocation3], 0
    %10 = vsyncpa [#allocation6], 0
    %11 = vsyncpa [#allocation4], 0
    // Predicated region
    $region2: #{tpu_custom_call.1} parent=1 // pred_check
      _
    $region3: #{tpu_custom_call.1} parent=1 // pred_check_branch
      %13 = sbr.rel (0) target = $region5
    $region4: #{tpu_custom_call.1} parent=1 // pred_region
      %s15 = ssub.s32 128, 128
      %16 = vsyncadd [#allocation3], %s15
      %s18 = sshll.u32 [#allocation2], 4
      %s19 = int_to_ptr.vmem [resolvable:$true] %s18
      %21 = dma.hbm_to_vmem [thread:$0]  %s0, 128, %s19, [#allocation3]
    $region5: #{tpu_custom_call.1} parent=1 // pred_fallthru
      _
    // Predicated region
    $region6: #{tpu_custom_call.1} parent=1 // pred_check
      _
    $region7: #{tpu_custom_call.1} parent=1 // pred_check_branch
      %23 = sbr.rel (0) target = $region9
    $region8: #{tpu_custom_call.1} parent=1 // pred_region
      %s25 = ssub.s32 2048, 2048
      %26 = vsyncadd [#allocation6], %s25
      %s27 = sshll.u32 [#allocation5], 4
      %s28 = int_to_ptr.vmem [resolvable:$true] %s27
      %33 = dma.hbm_to_vmem [thread:$0]  %s1, 2048, %s28, [#allocation6], 128, 128, 8
    $region9: #{tpu_custom_call.1} parent=1 // pred_fallthru
      _
    // Predicated region
    $region10: #{tpu_custom_call.1} parent=1 // pred_check
      _
    $region11: #{tpu_custom_call.1} parent=1 // pred_check_branch
      %35 = sbr.rel (0) target = $region13
    $region12: #{tpu_custom_call.1} parent=1 // pred_region
      _
    $region13: #{tpu_custom_call.1} parent=1 // pred_fallthru
      _
    // Predicated region
    $region14: #{tpu_custom_call.1} parent=1 // pred_check
      _
    $region15: #{tpu_custom_call.1} parent=1 // pred_check_branch
      %37 = sbr.rel (0) target = $region17
    $region16: #{tpu_custom_call.1} parent=1 // pred_region
      %s39 = ssub.s32 4096, 4096
      %40 = vsyncadd [#allocation6], %s39
      %s41 = sshll.u32 [#allocation7], 4
      %s42 = int_to_ptr.vmem [resolvable:$true] %s41
      %47 = dma.hbm_to_vmem [thread:$0]  %s3, 4096, %s42, [#allocation6], 128, 128, 8
    $region17: #{tpu_custom_call.1} parent=1 // pred_fallthru
      _
    // Predicated region
    $region18: #{tpu_custom_call.1} parent=1 // pred_check
      _
    $region19: #{tpu_custom_call.1} parent=1 // pred_check_branch
      %49 = sbr.rel (0) target = $region21
    $region20: #{tpu_custom_call.1} parent=1 // pred_region
      %50 = dma.done [#allocation3], 128
    $region21: #{tpu_custom_call.1} parent=1 // pred_fallthru
      _
    // Predicated region
    $region22: #{tpu_custom_call.1} parent=1 // pred_check
      _
    $region23: #{tpu_custom_call.1} parent=1 // pred_check_branch
      %52 = sbr.rel (0) target = $region25
    $region24: #{tpu_custom_call.1} parent=1 // pred_region
      %53 = dma.done [#allocation6], 2048
    $region25: #{tpu_custom_call.1} parent=1 // pred_fallthru
      _
    // Predicated region
    $region26: #{tpu_custom_call.1} parent=1 // pred_check
      _
    $region27: #{tpu_custom_call.1} parent=1 // pred_check_branch
      %55 = sbr.rel (0) target = $region29
    $region28: #{tpu_custom_call.1} parent=1 // pred_region
      %56 = dma.done [#allocation6], 4096
    $region29: #{tpu_custom_call.1} parent=1 // pred_fallthru
      _
    %v57 = vld [vmem:[#allocation2] sm:$0xff]
    %v58 = vld [vmem:[#allocation5] sm:$0xff]
    %v59 = vld [vmem:[#allocation5 + $0x8] sm:$0xff]
    %v60 = vld [vmem:[#allocation5 + $0x10] sm:$0xff]
    %v61 = vld [vmem:[#allocation5 + $0x18] sm:$0xff]
    %v62 = vld [vmem:[#allocation5 + $0x20] sm:$0xff]
    %v63 = vld [vmem:[#allocation5 + $0x28] sm:$0xff]
    %v64 = vld [vmem:[#allocation5 + $0x30] sm:$0xff]
    %v65 = vld [vmem:[#allocation5 + $0x38] sm:$0xff]
    %v66 = vld [vmem:[#allocation5 + $0x40] sm:$0xff]
    %v67 = vld [vmem:[#allocation5 + $0x48] sm:$0xff]
    %v68 = vld [vmem:[#allocation5 + $0x50] sm:$0xff]
    %v69 = vld [vmem:[#allocation5 + $0x58] sm:$0xff]
    %v70 = vld [vmem:[#allocation5 + $0x60] sm:$0xff]
    %v71 = vld [vmem:[#allocation5 + $0x68] sm:$0xff]
    %v72 = vld [vmem:[#allocation5 + $0x70] sm:$0xff]
    %v73 = vld [vmem:[#allocation5 + $0x78] sm:$0xff]
    %v74 = vld [vmem:[%s2] sm:$0x1]
    %v75 = vlaneseq
    %v76 = vshrl.u32 %v75, 7
    %v77 = vsub.s32 0, %v76
    %v78 = vrot.slane %v74, %v77
    %79 = vmatprep.subr.mxu0 0.0
    %80 = vmatpush1.msra.mxu0 %v58
    %81 = vmatprep.subr.mxu0 0.0
    %82 = vmatpush1.msra.mxu0 %v59
    %83 = vmatprep.subr.mxu0 0.0
    %84 = vmatpush1.msra.mxu0 %v60
    %85 = vmatprep.subr.mxu0 0.0
    %86 = vmatpush1.msra.mxu0 %v61
    %87 = vmatprep.subr.mxu0 0.0
    %88 = vmatpush1.msra.mxu0 %v62
    %89 = vmatprep.subr.mxu0 0.0
    %90 = vmatpush1.msra.mxu0 %v63
    %91 = vmatprep.subr.mxu0 0.0
    %92 = vmatpush1.msra.mxu0 %v64
    %93 = vmatprep.subr.mxu0 0.0
    %94 = vmatpush1.msra.mxu0 %v65
    %95 = vmatprep.subr.mxu0 0.0
    %96 = vmatpush1.msra.mxu0 %v66
    %97 = vmatprep.subr.mxu0 0.0
    %98 = vmatpush1.msra.mxu0 %v67
    %99 = vmatprep.subr.mxu0 0.0
    %100 = vmatpush1.msra.mxu0 %v68
    %101 = vmatprep.subr.mxu0 0.0
    %102 = vmatpush1.msra.mxu0 %v69
    %103 = vmatprep.subr.mxu0 0.0
    %104 = vmatpush1.msra.mxu0 %v70
    %105 = vmatprep.subr.mxu0 0.0
    %106 = vmatpush1.msra.mxu0 %v71
    %107 = vmatprep.subr.mxu0 0.0
    %108 = vmatpush1.msra.mxu0 %v72
    %109 = vmatprep.subr.mxu0 0.0
    %110 = vmatpush1.msra.mxu0 %v73
    %111 = vmatprep.subr.mxu0 0.0
    %112 = vmatpush1.msra.mxu0 0.0
    %113 = vmatprep.subr.mxu0 0.0
    %114 = vmatpush1.msra.mxu0 0.0
    %115 = vmatprep.subr.mxu0 0.0
    %116 = vmatpush1.msra.mxu0 0.0
    %117 = vmatprep.subr.mxu0 0.0
    %118 = vmatpush1.msra.mxu0 0.0
    %119 = vmatprep.subr.mxu0 0.0
    %120 = vmatpush1.msra.mxu0 0.0
    %121 = vmatprep.subr.mxu0 0.0
    %122 = vmatpush1.msra.mxu0 0.0
    %123 = vmatprep.subr.mxu0 0.0
    %124 = vmatpush1.msra.mxu0 0.0
    %125 = vmatprep.subr.mxu0 0.0
    %126 = vmatpush1.msra.mxu0 0.0
    %127 = vmatprep.subr.mxu0 0.0
    %128 = vmatpush1.msra.mxu0 0.0
    %129 = vmatprep.subr.mxu0 0.0
    %130 = vmatpush1.msra.mxu0 0.0
    %131 = vmatprep.subr.mxu0 0.0
    %132 = vmatpush1.msra.mxu0 0.0
    %133 = vmatprep.subr.mxu0 0.0
    %134 = vmatpush1.msra.mxu0 0.0
    %135 = vmatprep.subr.mxu0 0.0
    %136 = vmatpush1.msra.mxu0 0.0
    %137 = vmatprep.subr.mxu0 0.0
    %138 = vmatpush1.msra.mxu0 0.0
    %139 = vmatprep.subr.mxu0 0.0
    %140 = vmatpush1.msra.mxu0 0.0
    %141 = vmatprep.subr.mxu0 0.0
    %142 = vmatpush1.msra.mxu0 0.0
    %143 = vmatprep.mubr.f32.mxu0 0.0
    %144 = vmatmul.mubr.f32.gmra.mrb[0].mxu0 %v57
    %v145 = vpop.f32.mrb[0].mxu0
    %v146 = vadd.f32 %v78, %v145
    %v147 = vpop.f32.mrb[0].mxu0
    %148 = vdwg.mxu0
    %v149 = vxor.u32 %v146, 2147483648
    %v150 = vmul.f32 %v149, 1.442695
    %v151 = vpow.pop %v150
    %v152 = vadd.f32 %v151, 1.0
    %v153 = vrcp.pop %v152
    %v154 = vmul.f32 1.0, %v153
    %v155 = vmul.f32 %v146, %v154
    %v156 = vld [vmem:[#allocation7] sm:$0xff]
    %v157 = vld [vmem:[#allocation7 + $0x8] sm:$0xff]
    %v158 = vld [vmem:[#allocation7 + $0x10] sm:$0xff]
    %v159 = vld [vmem:[#allocation7 + $0x18] sm:$0xff]
    %v160 = vld [vmem:[#allocation7 + $0x20] sm:$0xff]
    %v161 = vld [vmem:[#allocation7 + $0x28] sm:$0xff]
    %v162 = vld [vmem:[#allocation7 + $0x30] sm:$0xff]
    %v163 = vld [vmem:[#allocation7 + $0x38] sm:$0xff]
    %v164 = vld [vmem:[#allocation7 + $0x40] sm:$0xff]
    %v165 = vld [vmem:[#allocation7 + $0x48] sm:$0xff]
    %v166 = vld [vmem:[#allocation7 + $0x50] sm:$0xff]
    %v167 = vld [vmem:[#allocation7 + $0x58] sm:$0xff]
    %v168 = vld [vmem:[#allocation7 + $0x60] sm:$0xff]
    %v169 = vld [vmem:[#allocation7 + $0x68] sm:$0xff]
    %v170 = vld [vmem:[#allocation7 + $0x70] sm:$0xff]
    %v171 = vld [vmem:[#allocation7 + $0x78] sm:$0xff]
    %v172 = vld [vmem:[%s2 + $0x1] sm:$0x1]
    %v173 = vlaneseq
    %v174 = vshrl.u32 %v173, 7
    %v175 = vsub.s32 0, %v174
    %v176 = vrot.slane %v172, %v175
    %177 = vmatprep.subr.mxu0 0.0
    %178 = vmatpush1.msra.mxu0 %v156
    %179 = vmatprep.subr.mxu0 0.0
    %180 = vmatpush1.msra.mxu0 %v157
    %181 = vmatprep.subr.mxu0 0.0
    %182 = vmatpush1.msra.mxu0 %v158
    %183 = vmatprep.subr.mxu0 0.0
    %184 = vmatpush1.msra.mxu0 %v159
    %185 = vmatprep.subr.mxu0 0.0
    %186 = vmatpush1.msra.mxu0 %v160
    %187 = vmatprep.subr.mxu0 0.0
    %188 = vmatpush1.msra.mxu0 %v161
    %189 = vmatprep.subr.mxu0 0.0
    %190 = vmatpush1.msra.mxu0 %v162
    %191 = vmatprep.subr.mxu0 0.0
    %192 = vmatpush1.msra.mxu0 %v163
    %193 = vmatprep.subr.mxu0 0.0
    %194 = vmatpush1.msra.mxu0 %v164
    %195 = vmatprep.subr.mxu0 0.0
    %196 = vmatpush1.msra.mxu0 %v165
    %197 = vmatprep.subr.mxu0 0.0
    %198 = vmatpush1.msra.mxu0 %v166
    %199 = vmatprep.subr.mxu0 0.0
    %200 = vmatpush1.msra.mxu0 %v167
    %201 = vmatprep.subr.mxu0 0.0
    %202 = vmatpush1.msra.mxu0 %v168
    %203 = vmatprep.subr.mxu0 0.0
    %204 = vmatpush1.msra.mxu0 %v169
    %205 = vmatprep.subr.mxu0 0.0
    %206 = vmatpush1.msra.mxu0 %v170
    %207 = vmatprep.subr.mxu0 0.0
    %208 = vmatpush1.msra.mxu0 %v171
    %209 = vmatprep.subr.mxu0 0.0
    %210 = vmatpush1.msra.mxu0 0.0
    %211 = vmatprep.subr.mxu0 0.0
    %212 = vmatpush1.msra.mxu0 0.0
    %213 = vmatprep.subr.mxu0 0.0
    %214 = vmatpush1.msra.mxu0 0.0
    %215 = vmatprep.subr.mxu0 0.0
    %216 = vmatpush1.msra.mxu0 0.0
    %217 = vmatprep.subr.mxu0 0.0
    %218 = vmatpush1.msra.mxu0 0.0
    %219 = vmatprep.subr.mxu0 0.0
    %220 = vmatpush1.msra.mxu0 0.0
    %221 = vmatprep.subr.mxu0 0.0
    %222 = vmatpush1.msra.mxu0 0.0
    %223 = vmatprep.subr.mxu0 0.0
    %224 = vmatpush1.msra.mxu0 0.0
    %225 = vmatprep.subr.mxu0 0.0
    %226 = vmatpush1.msra.mxu0 0.0
    %227 = vmatprep.subr.mxu0 0.0
    %228 = vmatpush1.msra.mxu0 0.0
    %229 = vmatprep.subr.mxu0 0.0
    %230 = vmatpush1.msra.mxu0 0.0
    %231 = vmatprep.subr.mxu0 0.0
    %232 = vmatpush1.msra.mxu0 0.0
    %233 = vmatprep.subr.mxu0 0.0
    %234 = vmatpush1.msra.mxu0 0.0
    %235 = vmatprep.subr.mxu0 0.0
    %236 = vmatpush1.msra.mxu0 0.0
    %237 = vmatprep.subr.mxu0 0.0
    %238 = vmatpush1.msra.mxu0 0.0
    %239 = vmatprep.subr.mxu0 0.0
    %240 = vmatpush1.msra.mxu0 0.0
    %241 = vmatprep.mubr.f32.mxu0 0.0
    %242 = vmatmul.mubr.f32.gmra.mrb[0].mxu0 %v155
    %v243 = vpop.f32.mrb[0].mxu0
    %v244 = vadd.f32 %v176, %v243
    %v245 = vpop.f32.mrb[0].mxu0
    %246 = vdwg.mxu0
    %v247 = vxor.u32 %v244, 2147483648
    %v248 = vmul.f32 %v247, 1.442695
    %v249 = vpow.pop %v248
    %v250 = vadd.f32 %v249, 1.0
    %v251 = vrcp.pop %v250
    %v252 = vmul.f32 1.0, %v251
    %v253 = vmul.f32 %v244, %v252
    %s254 = scalar_lea.vmem [#allocation7], 128
    %v255 = vld [vmem:[%s254] sm:$0xff]
    %v256 = vld [vmem:[%s254 + $0x8] sm:$0xff]
    %v257 = vld [vmem:[%s254 + $0x10] sm:$0xff]
    %v258 = vld [vmem:[%s254 + $0x18] sm:$0xff]
    %v259 = vld [vmem:[%s254 + $0x20] sm:$0xff]
    %v260 = vld [vmem:[%s254 + $0x28] sm:$0xff]
    %v261 = vld [vmem:[%s254 + $0x30] sm:$0xff]
    %v262 = vld [vmem:[%s254 + $0x38] sm:$0xff]
    %v263 = vld [vmem:[%s254 + $0x40] sm:$0xff]
    %v264 = vld [vmem:[%s254 + $0x48] sm:$0xff]
    %v265 = vld [vmem:[%s254 + $0x50] sm:$0xff]
    %v266 = vld [vmem:[%s254 + $0x58] sm:$0xff]
    %v267 = vld [vmem:[%s254 + $0x60] sm:$0xff]
    %v268 = vld [vmem:[%s254 + $0x68] sm:$0xff]
    %v269 = vld [vmem:[%s254 + $0x70] sm:$0xff]
    %v270 = vld [vmem:[%s254 + $0x78] sm:$0xff]
    %v271 = vld [vmem:[%s2 + $0x2] sm:$0x1]
    %v272 = vlaneseq
    %v273 = vshrl.u32 %v272, 7
    %v274 = vsub.s32 0, %v273
    %v275 = vrot.slane %v271, %v274
    %276 = vmatprep.subr.mxu0 0.0
    %277 = vmatpush1.msra.mxu0 %v255
    %278 = vmatprep.subr.mxu0 0.0
    %279 = vmatpush1.msra.mxu0 %v256
    %280 = vmatprep.subr.mxu0 0.0
    %281 = vmatpush1.msra.mxu0 %v257
    %282 = vmatprep.subr.mxu0 0.0
    %283 = vmatpush1.msra.mxu0 %v258
    %284 = vmatprep.subr.mxu0 0.0
    %285 = vmatpush1.msra.mxu0 %v259
    %286 = vmatprep.subr.mxu0 0.0
    %287 = vmatpush1.msra.mxu0 %v260
    %288 = vmatprep.subr.mxu0 0.0
    %289 = vmatpush1.msra.mxu0 %v261
    %290 = vmatprep.subr.mxu0 0.0
    %291 = vmatpush1.msra.mxu0 %v262
    %292 = vmatprep.subr.mxu0 0.0
    %293 = vmatpush1.msra.mxu0 %v263
    %294 = vmatprep.subr.mxu0 0.0
    %295 = vmatpush1.msra.mxu0 %v264
    %296 = vmatprep.subr.mxu0 0.0
    %297 = vmatpush1.msra.mxu0 %v265
    %298 = vmatprep.subr.mxu0 0.0
    %299 = vmatpush1.msra.mxu0 %v266
    %300 = vmatprep.subr.mxu0 0.0
    %301 = vmatpush1.msra.mxu0 %v267
    %302 = vmatprep.subr.mxu0 0.0
    %303 = vmatpush1.msra.mxu0 %v268
    %304 = vmatprep.subr.mxu0 0.0
    %305 = vmatpush1.msra.mxu0 %v269
    %306 = vmatprep.subr.mxu0 0.0
    %307 = vmatpush1.msra.mxu0 %v270
    %308 = vmatprep.subr.mxu0 0.0
    %309 = vmatpush1.msra.mxu0 0.0
    %310 = vmatprep.subr.mxu0 0.0
    %311 = vmatpush1.msra.mxu0 0.0
    %312 = vmatprep.subr.mxu0 0.0
    %313 = vmatpush1.msra.mxu0 0.0
    %314 = vmatprep.subr.mxu0 0.0
    %315 = vmatpush1.msra.mxu0 0.0
    %316 = vmatprep.subr.mxu0 0.0
    %317 = vmatpush1.msra.mxu0 0.0
    %318 = vmatprep.subr.mxu0 0.0
    %319 = vmatpush1.msra.mxu0 0.0
    %320 = vmatprep.subr.mxu0 0.0
    %321 = vmatpush1.msra.mxu0 0.0
    %322 = vmatprep.subr.mxu0 0.0
    %323 = vmatpush1.msra.mxu0 0.0
    %324 = vmatprep.subr.mxu0 0.0
    %325 = vmatpush1.msra.mxu0 0.0
    %326 = vmatprep.subr.mxu0 0.0
    %327 = vmatpush1.msra.mxu0 0.0
    %328 = vmatprep.subr.mxu0 0.0
    %329 = vmatpush1.msra.mxu0 0.0
    %330 = vmatprep.subr.mxu0 0.0
    %331 = vmatpush1.msra.mxu0 0.0
    %332 = vmatprep.subr.mxu0 0.0
    %333 = vmatpush1.msra.mxu0 0.0
    %334 = vmatprep.subr.mxu0 0.0
    %335 = vmatpush1.msra.mxu0 0.0
    %336 = vmatprep.subr.mxu0 0.0
    %337 = vmatpush1.msra.mxu0 0.0
    %338 = vmatprep.subr.mxu0 0.0
    %339 = vmatpush1.msra.mxu0 0.0
    %340 = vmatprep.mubr.f32.mxu0 0.0
    %341 = vmatmul.mubr.f32.gmra.mrb[0].mxu0 %v253
    %v342 = vpop.f32.mrb[0].mxu0
    %v343 = vadd.f32 %v275, %v342
    %v344 = vpop.f32.mrb[0].mxu0
    %345 = vdwg.mxu0
    %v346 = vxor.u32 %v343, 2147483648
    %v347 = vmul.f32 %v346, 1.442695
    %v348 = vpow.pop %v347
    %v349 = vadd.f32 %v348, 1.0
    %v350 = vrcp.pop %v349
    %v351 = vmul.f32 1.0, %v350
    %v352 = vmul.f32 %v343, %v351
    %353 = vst [vmem:[#allocation8] sm:$0xff] %v352
    // Predicated region
    $region30: #{tpu_custom_call.1} parent=1 // pred_check
      _
    $region31: #{tpu_custom_call.1} parent=1 // pred_check_branch
      %355 = sbr.rel (0) target = $region33
    $region32: #{tpu_custom_call.1} parent=1 // pred_region
      %s357 = ssub.s32 128, 128
      %358 = vsyncadd [#allocation4], %s357
      %s360 = sshll.u32 [#allocation8], 4
      %s361 = int_to_ptr.vmem [resolvable:$true] %s360
      %363 = dma.vmem_to_hbm [thread:$0]  %s361, 128, %s4, [#allocation4]
    $region33: #{tpu_custom_call.1} parent=1 // pred_fallthru
      _
    // Predicated region
    $region34: #{tpu_custom_call.1} parent=1 // pred_check
      _
    $region35: #{tpu_custom_call.1} parent=1 // pred_check_branch
      %365 = sbr.rel (0) target = $region37
    $region36: #{tpu_custom_call.1} parent=1 // pred_region
      %366 = dma.done [#allocation4], 128
    $region37: #{tpu_custom_call.1} parent=1 // pred_fallthru
      _
    %367 = vsyncpa [#allocation3], 1
    %368 = vsyncpa [#allocation6], 1
    %369 = vsyncpa [#allocation4], 1

</llo_original>
